<compile_context>
chip_gen: v7x
topology: tpu7x:2x2x1
jax: 0.10.0
libtpu: 0.0.40
codegen_flags: <defaults>
</compile_context>

<pallas_src>
import math
import jax
import jax.numpy as jnp
from jax import lax
from jax.experimental import pallas as pl
from jax.experimental.pallas import tpu as pltpu


# ----------------------------------------------------------------------------
# Fused kernel: one (batch, L1-tile) point per grid step.
# ----------------------------------------------------------------------------
def _cross_attn_head_kernel(x_ref, xt_ref, wq_ref, wkv_ref, bq_ref, bkv_ref, o_ref):
    d = o_ref.shape[-1]

    # Channel-major, lane-dense activation tiles; cast to bf16 for the MXU.
    x_cl = x_ref[0].astype(jnp.bfloat16)     # (C1, TQ)
    xt_cl = xt_ref[0].astype(jnp.bfloat16)   # (C2, L2)

    # Q = x^T Wq + bq. The 1/sqrt(D) softmax scale is pre-folded into wq/bq.
    q = lax.dot_general(x_cl, wq_ref[...], (((0,), (0,)), ((), ())),
                        preferred_element_type=jnp.float32)
    q = (q + bq_ref[...]).astype(jnp.bfloat16)            # (TQ, D) bf16, short f32 life

    # K|V = xt^T [Wk|Wv] + [bk|bv] in a single MXU op; cast early, slice bf16.
    kv = lax.dot_general(xt_cl, wkv_ref[...], (((0,), (0,)), ((), ())),
                         preferred_element_type=jnp.float32)
    kv = (kv + bkv_ref[...]).astype(jnp.bfloat16)          # (L2, 2D)
    k = kv[:, :d]                                          # (L2, D) lane-aligned slice
    v = kv[:, d:]                                          # (L2, D)

    # scores = (Q / sqrt(D)) K^T : contract last dims directly (no transpose).
    scores = lax.dot_general(q, k, (((1,), (1,)), ((), ())),
                             preferred_element_type=jnp.float32)   # (TQ, L2) f32

    # Numerically stable softmax over L2 (f32 on VPU/XLU; reciprocal on EUP).
    scores = scores - jnp.max(scores, axis=-1, keepdims=True)
    p = jnp.exp(scores)
    inv_den = pl.reciprocal(jnp.sum(p, axis=-1, keepdims=True), approx=True)
    attn = (p * inv_den).astype(jnp.bfloat16)
    # TODO(synk): train-mode dropout on `attn` skipped (eval-mode identity).

    # out = attn @ V, lane-dense full-width store.
    o_ref[0] = jnp.dot(attn, v, preferred_element_type=jnp.float32)   # (TQ, D)


# ----------------------------------------------------------------------------
# One-time parameter packing (keep the result cached; do NOT redo per call).
# ----------------------------------------------------------------------------
def prepare_cross_attention_params(params):
    """params: wq (C1,D), bq (D,), wk/wv (C2,D), bk/bv (D,) — all f32, (in,out) layout."""
    out_dim = params["wq"].shape[-1]
    scale = 1.0 / math.sqrt(out_dim)
    return {
        "wq": (params["wq"] * scale).astype(jnp.bfloat16),                        # (C1, D)
        "bq": (params["bq"] * scale).reshape(1, -1).astype(jnp.float32),          # (1, D)
        "wkv": jnp.concatenate([params["wk"], params["wv"]], axis=-1)
                 .astype(jnp.bfloat16),                                           # (C2, 2D)
        "bkv": jnp.concatenate([params["bk"], params["bv"]])
                 .reshape(1, -1).astype(jnp.float32),                             # (1, 2D)
    }


# ----------------------------------------------------------------------------
# Forward: only free reshapes + one pallas_call per invocation.
# ----------------------------------------------------------------------------
def cross_attention_head_forward(x, xt, packed):
    """x: (B, in_dim1, H, W); xt: (B, in_dim2, H2, W2). Returns (B, L1, out_dim) f32."""
    B, C1 = x.shape[0], x.shape[1]
    C2 = xt.shape[1]
    x_cl = x.reshape(B, C1, -1)      # (B, C1, L1)  == x.flatten(2); no transpose
    xt_cl = xt.reshape(B, C2, -1)    # (B, C2, L2)
    L1, L2 = x_cl.shape[-1], xt_cl.shape[-1]
    D = packed["wq"].shape[-1]

    TQ = 128 if L1 % 128 == 0 else L1     # L1 tile (full L1 if not 128-aligned)
    n_q = L1 // TQ

    return pl.pallas_call(
        _cross_attn_head_kernel,
        out_shape=jax.ShapeDtypeStruct((B, L1, D), jnp.float32),
        grid_spec=pltpu.PrefetchScalarGridSpec(
            num_scalar_prefetch=0,
            grid=(B, n_q),
            in_specs=[
                pl.BlockSpec((1, C1, TQ), lambda b, i: (b, 0, i)),     # x  (channel-major)
                pl.BlockSpec((1, C2, L2), lambda b, i: (b, 0, 0)),     # xt (channel-major)
                pl.BlockSpec((C1, D), lambda b, i: (0, 0)),            # wq (pre-scaled, bf16)
                pl.BlockSpec((C2, 2 * D), lambda b, i: (0, 0)),        # [wk|wv] stacked, bf16
                pl.BlockSpec((1, D), lambda b, i: (0, 0)),             # bq (pre-scaled, f32)
                pl.BlockSpec((1, 2 * D), lambda b, i: (0, 0)),         # [bk|bv] stacked, f32
            ],
            out_specs=pl.BlockSpec((1, TQ, D), lambda b, i: (b, i, 0)),
        ),
        compiler_params=pltpu.CompilerParams(
            dimension_semantics=("parallel", "parallel")),
    )(x_cl, xt_cl, packed["wq"], packed["wkv"], packed["bq"], packed["bkv"])


# ----------------------------------------------------------------------------
# Pure-JAX f32 reference (for correctness check).
# ----------------------------------------------------------------------------
def reference_forward(x, xt, params):
    B = x.shape[0]
    x_seq = x.reshape(B, x.shape[1], -1).transpose(0, 2, 1)
    xt_seq = xt.reshape(B, xt.shape[1], -1).transpose(0, 2, 1)
    q = x_seq @ params["wq"] + params["bq"]
    k = xt_seq @ params["wk"] + params["bk"]
    v = xt_seq @ params["wv"] + params["bv"]
    d = params["wq"].shape[-1]
    s = jnp.einsum("bld,bmd->blm", q, k) / math.sqrt(d)
    a = jax.nn.softmax(s, axis=-1)
    return jnp.einsum("blm,bmd->bld", a, v)


if __name__ == "__main__":
    # Module config (small, lane/sublane aligned).
    in_dim1 = 16      # channels of x
    in_dim2 = 8       # channels of xt
    out_dim = 128     # head output dim (lane-dense output)

    B = 2
    H1, W1 = 16, 8    # L1 = 128
    H2, W2 = 16, 8    # L2 = 128

    key = jax.random.PRNGKey(0)
    ks = jax.random.split(key, 8)

    x = jax.random.normal(ks[0], (B, in_dim1, H1, W1), dtype=jnp.float32)
    xt = jax.random.normal(ks[1], (B, in_dim2, H2, W2), dtype=jnp.float32)

    s1 = 1.0 / math.sqrt(in_dim1)
    s2 = 1.0 / math.sqrt(in_dim2)
    params = {
        # weights stored already transposed (in, out) for direct matmul
        "wq": jax.random.uniform(ks[2], (in_dim1, out_dim), jnp.float32, -s1, s1),
        "bq": jax.random.uniform(ks[3], (out_dim,), jnp.float32, -s1, s1),
        "wk": jax.random.uniform(ks[4], (in_dim2, out_dim), jnp.float32, -s2, s2),
        "bk": jax.random.uniform(ks[5], (out_dim,), jnp.float32, -s2, s2),
        "wv": jax.random.uniform(ks[6], (in_dim2, out_dim), jnp.float32, -s2, s2),
        "bv": jax.random.uniform(ks[7], (out_dim,), jnp.float32, -s2, s2),
    }

    packed = jax.tree_util.tree_map(jax.block_until_ready,
                                    prepare_cross_attention_params(params))

    out = cross_attention_head_forward(x, xt, packed)
    out = jax.block_until_ready(out)

    ref = reference_forward(x, xt, params)
    assert out.shape == (B, H1 * W1, out_dim), out.shape
    max_err = float(jnp.max(jnp.abs(out - ref)))
    # bf16 MXU operands (f32 accumulation) + approx reciprocal vs pure-f32 reference.
    assert max_err < 2e-2, max_err

    print("KERNEL_OK")
</pallas_src>

<mosaic_0001>
module attributes {stable_mosaic.version = 11 : i64} {
  func.func @_cross_attn_head_kernel(%arg0: i32, %arg1: i32, %arg2: memref<1x16x128xf32, #tpu.memory_space<vmem>>, %arg3: memref<1x8x128xf32, #tpu.memory_space<vmem>>, %arg4: memref<16x128xbf16, #tpu.memory_space<vmem>>, %arg5: memref<8x256xbf16, #tpu.memory_space<vmem>>, %arg6: memref<1x128xf32, #tpu.memory_space<vmem>>, %arg7: memref<1x256xf32, #tpu.memory_space<vmem>>, %arg8: memref<1x128x128xf32, #tpu.memory_space<vmem>>) attributes {dimension_semantics = [#tpu.dimension_semantics<parallel>, #tpu.dimension_semantics<parallel>], iteration_bounds = array<i64: 2, 1>, scalar_prefetch = 0 : i64, scratch_operands = 0 : i64, tpu.core_type = #tpu.core_type<tc>, window_params = [{transform_indices = @transform_0, window_bounds = array<i64: 1, 16, 128>}, {transform_indices = @transform_1, window_bounds = array<i64: 1, 8, 128>}, {pipeline_mode = #tpu.pipeline_mode<synchronous>, transform_indices = @transform_2, window_bounds = array<i64: 16, 128>}, {pipeline_mode = #tpu.pipeline_mode<synchronous>, transform_indices = @transform_3, window_bounds = array<i64: 8, 256>}, {pipeline_mode = #tpu.pipeline_mode<synchronous>, transform_indices = @transform_4, window_bounds = array<i64: 1, 128>}, {pipeline_mode = #tpu.pipeline_mode<synchronous>, transform_indices = @transform_5, window_bounds = array<i64: 1, 256>}, {transform_indices = @transform_6, window_bounds = array<i64: 1, 128, 128>}]} {
    %c0 = arith.constant 0 : index
    %c0_0 = arith.constant 0 : index
    %c0_1 = arith.constant 0 : index
    %0 = vector.load %arg2[%c0, %c0_0, %c0_1] : memref<1x16x128xf32, #tpu.memory_space<vmem>>, vector<1x16x128xf32>
    %1 = vector.shape_cast %0 : vector<1x16x128xf32> to vector<16x128xf32>
    %2 = arith.truncf %1 : vector<16x128xf32> to vector<16x128xbf16>
    %c0_2 = arith.constant 0 : index
    %c0_3 = arith.constant 0 : index
    %c0_4 = arith.constant 0 : index
    %3 = vector.load %arg3[%c0_2, %c0_3, %c0_4] : memref<1x8x128xf32, #tpu.memory_space<vmem>>, vector<1x8x128xf32>
    %4 = vector.shape_cast %3 : vector<1x8x128xf32> to vector<8x128xf32>
    %5 = arith.truncf %4 : vector<8x128xf32> to vector<8x128xbf16>
    %c0_5 = arith.constant 0 : index
    %c0_6 = arith.constant 0 : index
    %6 = vector.load %arg4[%c0_5, %c0_6] : memref<16x128xbf16, #tpu.memory_space<vmem>>, vector<16x128xbf16>
    %cst = arith.constant dense<0.000000e+00> : vector<128x128xf32>
    %7 = tpu.matmul %2, %6, %cst {dimension_numbers = #tpu.dot_dimension_numbers<[0], [0], [1], [1], [0, 1, 1, 1], [], []>} : vector<16x128xbf16>, vector<16x128xbf16>, vector<128x128xf32> -> vector<128x128xf32>
    %c0_7 = arith.constant 0 : index
    %c0_8 = arith.constant 0 : index
    %8 = vector.load %arg6[%c0_7, %c0_8] : memref<1x128xf32, #tpu.memory_space<vmem>>, vector<1x128xf32>
    %9 = vector.broadcast %8 : vector<1x128xf32> to vector<128x128xf32>
    %10 = arith.addf %7, %9 : vector<128x128xf32>
    %11 = arith.truncf %10 : vector<128x128xf32> to vector<128x128xbf16>
    %c0_9 = arith.constant 0 : index
    %c0_10 = arith.constant 0 : index
    %12 = vector.load %arg5[%c0_9, %c0_10] : memref<8x256xbf16, #tpu.memory_space<vmem>>, vector<8x256xbf16>
    %cst_11 = arith.constant dense<0.000000e+00> : vector<128x256xf32>
    %13 = tpu.matmul %5, %12, %cst_11 {dimension_numbers = #tpu.dot_dimension_numbers<[0], [0], [1], [1], [0, 1, 1, 1], [], []>} : vector<8x128xbf16>, vector<8x256xbf16>, vector<128x256xf32> -> vector<128x256xf32>
    %c0_12 = arith.constant 0 : index
    %c0_13 = arith.constant 0 : index
    %14 = vector.load %arg7[%c0_12, %c0_13] : memref<1x256xf32, #tpu.memory_space<vmem>>, vector<1x256xf32>
    %15 = vector.broadcast %14 : vector<1x256xf32> to vector<128x256xf32>
    %16 = arith.addf %13, %15 : vector<128x256xf32>
    %17 = arith.truncf %16 : vector<128x256xf32> to vector<128x256xbf16>
    %18 = vector.extract_strided_slice %17 {offsets = [0, 0], sizes = [128, 128], strides = [1, 1]} : vector<128x256xbf16> to vector<128x128xbf16>
    %19 = vector.extract_strided_slice %17 {offsets = [0, 128], sizes = [128, 128], strides = [1, 1]} : vector<128x256xbf16> to vector<128x128xbf16>
    %cst_14 = arith.constant dense<0.000000e+00> : vector<128x128xf32>
    %20 = tpu.matmul %11, %18, %cst_14 {dimension_numbers = #tpu.dot_dimension_numbers<[1], [1], [0], [0], [0, 0, 1, 0], [], []>} : vector<128x128xbf16>, vector<128x128xbf16>, vector<128x128xf32> -> vector<128x128xf32>
    %cst_15 = arith.constant dense<0xFF800000> : vector<128xf32>
    %21 = vector.multi_reduction <maximumf>, %20, %cst_15 [1] : vector<128x128xf32> to vector<128xf32>
    %22 = vector.shape_cast %21 : vector<128xf32> to vector<128x1xf32>
    %23 = vector.broadcast %22 : vector<128x1xf32> to vector<128x128xf32>
    %24 = arith.subf %20, %23 : vector<128x128xf32>
    %25 = math.exp %24 : vector<128x128xf32>
    %cst_16 = arith.constant dense<0.000000e+00> : vector<128xf32>
    %26 = vector.multi_reduction <add>, %25, %cst_16 [1] : vector<128x128xf32> to vector<128xf32>
    %27 = vector.shape_cast %26 : vector<128xf32> to vector<128x1xf32>
    %28 = tpu.reciprocal %27 {approx = true} : vector<128x1xf32> -> vector<128x1xf32>
    %29 = vector.broadcast %28 : vector<128x1xf32> to vector<128x128xf32>
    %30 = arith.mulf %25, %29 : vector<128x128xf32>
    %31 = arith.truncf %30 : vector<128x128xf32> to vector<128x128xbf16>
    %cst_17 = arith.constant dense<0.000000e+00> : vector<128x128xf32>
    %32 = tpu.matmul %31, %19, %cst_17 {dimension_numbers = #tpu.dot_dimension_numbers<[1], [0], [0], [1], [0, 0, 1, 1], [], []>} : vector<128x128xbf16>, vector<128x128xbf16>, vector<128x128xf32> -> vector<128x128xf32>
    %c0_18 = arith.constant 0 : index
    %c0_19 = arith.constant 0 : index
    %c0_20 = arith.constant 0 : index
    %33 = vector.load %arg8[%c0_18, %c0_19, %c0_20] : memref<1x128x128xf32, #tpu.memory_space<vmem>>, vector<1x128x128xf32>
    %34 = vector.shape_cast %33 : vector<1x128x128xf32> to vector<128x128xf32>
    %35 = vector.shape_cast %32 : vector<128x128xf32> to vector<1x128x128xf32>
    tpu.vector_store %arg8[%c0_18, %c0_19, %c0_20], %35 {strides = array<i32>} : memref<1x128x128xf32, #tpu.memory_space<vmem>>, vector<1x128x128xf32>,
    return
  }
  func.func @transform_0(%arg0: i32, %arg1: i32) -> (i32, i32, i32) {
    %c0_i32 = arith.constant 0 : i32
    %c0_i32_0 = arith.constant 0 : i32
    return %arg0, %c0_i32, %arg1 : i32, i32, i32
  }
  func.func @transform_1(%arg0: i32, %arg1: i32) -> (i32, i32, i32) {
    %c0_i32 = arith.constant 0 : i32
    %c0_i32_0 = arith.constant 0 : i32
    %c0_i32_1 = arith.constant 0 : i32
    return %arg0, %c0_i32, %c0_i32_0 : i32, i32, i32
  }
  func.func @transform_2(%arg0: i32, %arg1: i32) -> (i32, i32) {
    %c0_i32 = arith.constant 0 : i32
    %c0_i32_0 = arith.constant 0 : i32
    %c0_i32_1 = arith.constant 0 : i32
    return %c0_i32, %c0_i32_0 : i32, i32
  }
  func.func @transform_3(%arg0: i32, %arg1: i32) -> (i32, i32) {
    %c0_i32 = arith.constant 0 : i32
    %c0_i32_0 = arith.constant 0 : i32
    %c0_i32_1 = arith.constant 0 : i32
    return %c0_i32, %c0_i32_0 : i32, i32
  }
  func.func @transform_4(%arg0: i32, %arg1: i32) -> (i32, i32) {
    %c0_i32 = arith.constant 0 : i32
    %c0_i32_0 = arith.constant 0 : i32
    %c0_i32_1 = arith.constant 0 : i32
    return %c0_i32, %c0_i32_0 : i32, i32
  }
  func.func @transform_5(%arg0: i32, %arg1: i32) -> (i32, i32) {
    %c0_i32 = arith.constant 0 : i32
    %c0_i32_0 = arith.constant 0 : i32
    %c0_i32_1 = arith.constant 0 : i32
    return %c0_i32, %c0_i32_0 : i32, i32
  }
  func.func @transform_6(%arg0: i32, %arg1: i32) -> (i32, i32, i32) {
    %c0_i32 = arith.constant 0 : i32
    %c0_i32_0 = arith.constant 0 : i32
    return %arg0, %arg1, %c0_i32 : i32, i32, i32
  }
}

</mosaic_0001>

<llo_original>
// kernel: tpu_custom_call.1
$region0: #{tpu_custom_call.1}
  #allocation0 [shape = 'u32[]', space=smem, size = 0x4, offset = 0x4, fixed_abs, tag = 'smem constant byte address 0x4 - core index']
  #allocation1 [shape = 'u32[144,128]{1,0:T(1,128)}', space=vmem, size = 0x12000, scoped, tag = 'internal scratch']
  %s0 = inlined_call_operand.hbm [shape: f32[2,16,128], index: 0, kind: input, shape index: {}]
  %s1 = inlined_call_operand.hbm [shape: f32[2,8,128], index: 1, kind: input, shape index: {}]
  %s2 = inlined_call_operand.hbm [shape: bf16[16,128], index: 2, kind: input, shape index: {}]
  %s3 = inlined_call_operand.vmem [shape: bf16[8,256], index: 3, kind: input, shape index: {}]
  %s4 = inlined_call_operand.vmem [shape: f32[1,128], index: 4, kind: input, shape index: {}]
  %s5 = inlined_call_operand.vmem [shape: f32[1,256], index: 5, kind: input, shape index: {}]
  %s6 = inlined_call_operand.hbm [shape: f32[2,128,128], index: 6, kind: output, shape index: {}]
  %s7 = sld [smem:[#allocation0]]
  $region69: #{tpu_custom_call.1} parent=0
    _
  %s9 = ssub.s32 1, %s7
  %s10 = scalar_select 0, %s9, %s7
  $region1: #{tpu_custom_call.1} parent=0
    #allocation2 [shape = 'u8[16384]{0}', space=vmem, size = 0x4000, scoped, tag = 'input window, operand 0']
    #allocation3 [shape = 's32[2]{0}', space=sflag, size = 0x8, scoped, tag = 'scoped memory for tpu_custom_call.1']
    #allocation4 [shape = 's32[2]{0}', space=sflag, size = 0x8, scoped, tag = 'scoped memory for tpu_custom_call.1']
    #allocation5 [shape = 'u8[8192]{0}', space=vmem, size = 0x2000, scoped, tag = 'input window, operand 1']
    #allocation6 [shape = 's32[2]{0}', space=sflag, size = 0x8, scoped, tag = 'scoped memory for tpu_custom_call.1']
    #allocation7 [shape = 'u8[4096]{0}', space=vmem, size = 0x1000, scoped, tag = 'input window, operand 2, single buffered']
    #allocation8 [shape = 'u8[131072]{0}', space=vmem, size = 0x20000, scoped, tag = 'output window, operand 0']
    %11 = vsyncpa [#allocation3], 0
    %s12 = scalar_lea.sflag [#allocation3], 1
    %13 = vsyncpa %s12, 0
    %14 = vsyncpa [#allocation6], 0
    %s15 = scalar_lea.sflag [#allocation6], 1
    %16 = vsyncpa %s15, 0
    %17 = vsyncpa [#allocation4], 0
    %s18 = scalar_lea.sflag [#allocation4], 1
    %19 = vsyncpa %s18, 0
    loop: start=0, step=1, limit=4
    $region2: #{tpu_custom_call.1} parent=1 // loop_pre_header
      _
    $region3: #{tpu_custom_call.1} parent=1 // loop_header
      %s21 = sphi 0, %s25
      %p22 = scmp.ge.s32.totalorder %s21, 4
      %s28 = sphi 0, %s40
      %s29 = sphi 0, %s36
      %s30 = sphi 0, %s28
      %s31 = sphi 0, %s29
      %s32 = sphi 0, %s30
      %s33 = sphi 0, %s31
      %s45 = sphi 0, %s47
      %s48 = sphi 0, %s45
      %s49 = sphi 0, %s48
      %s65 = sphi 0, %s49
      %s71 = sphi 0, %s73
      %s74 = sphi 0, %s71
      %s75 = sphi 0, %s74
      %s91 = sphi 0, %s75
      %s95 = sphi 0, %s95
      %s97 = sphi 0, %s95
      %s98 = sphi 0, %s97
      %s112 = sphi 0, %s98
      %s116 = sphi 0, %s116
      %s118 = sphi 0, %s116
      %s119 = sphi 0, %s118
      %s133 = sphi 0, %s119
      %s137 = sphi 0, %s137
      %s139 = sphi 0, %s137
      %s140 = sphi 0, %s139
      %s154 = sphi 0, %s140
      %s158 = sphi 0, %s158
      %s160 = sphi 0, %s158
      %s161 = sphi 0, %s160
      %s175 = sphi 0, %s161
      %s183 = sphi 0, %s185
      %s186 = sphi 0, %s183
      %s187 = sphi 0, %s186
      %s203 = sphi 0, %s187
    $region4: #{tpu_custom_call.1} parent=1 // loop_header_branch
      %24 = sbr.rel (%p22) target = $region8
    $region5: #{tpu_custom_call.1} parent=1 // loop_body
      %s26 = ssub.s32 %s21, 1
      %s27 = ssub.s32 %s21, 2
      %s34 = sadd.s32 1, %s29
      %p35 = scmp.ge.s32.totalorder %s34, 1
      %s36 = scalar_select %p35, 0, %s34
      %s37 = sadd.s32 1, %s28
      %s38 = scalar_select %p35, %s37, %s28
      %p39 = scmp.ge.s32.totalorder %s38, 2
      %s40 = scalar_select %p39, 0, %s38
      %s41 = ssub.s32 %s28, %s40
      %s42 = ssub.s32 %s29, %s36
      %s43 = sor.u32 %s41, %s42
      %p44 = scmp.eq.s32.totalorder %s43, 0
      %s46 = sadd.s32 %s45, 1
      %s47 = scalar_select %p44, %s45, %s46
      %p50 = pneg %p44
      %p51 = scmp.eq.s32.totalorder %s21, 1
      %p52 = por %p50, %p51
      %p53 = scmp.ne.s32.totalorder %s45, %s48
      %p54 = scmp.eq.s32.totalorder %s21, 0
      %p55 = por %p53, %p54
      %p56 = scmp.ne.s32.totalorder %s45, %s48
      %p57 = scmp.eq.s32.totalorder %s26, 1
      %p58 = por %p56, %p57
      %p59 = scmp.ne.s32.totalorder %s48, %s49
      %p60 = scmp.eq.s32.totalorder %s26, 0
      %p61 = por %p59, %p60
      %p62 = scmp.ne.s32.totalorder %s48, %s49
      %p63 = scmp.eq.s32.totalorder %s27, 1
      %p64 = por %p62, %p63
      %p66 = scmp.ne.s32.totalorder %s49, %s65
      %p67 = scmp.eq.s32.totalorder %s27, 0
      %p68 = por %p66, %p67
      %s69 = ssub.s32 %s28, %s40
      %p70 = scmp.eq.s32.totalorder %s69, 0
      %s72 = sadd.s32 %s71, 1
      %s73 = scalar_select %p70, %s71, %s72
      %p76 = pneg %p70
      %p77 = scmp.eq.s32.totalorder %s21, 1
      %p78 = por %p76, %p77
      %p79 = scmp.ne.s32.totalorder %s71, %s74
      %p80 = scmp.eq.s32.totalorder %s21, 0
      %p81 = por %p79, %p80
      %p82 = scmp.ne.s32.totalorder %s71, %s74
      %p83 = scmp.eq.s32.totalorder %s26, 1
      %p84 = por %p82, %p83
      %p85 = scmp.ne.s32.totalorder %s74, %s75
      %p86 = scmp.eq.s32.totalorder %s26, 0
      %p87 = por %p85, %p86
      %p88 = scmp.ne.s32.totalorder %s74, %s75
      %p89 = scmp.eq.s32.totalorder %s27, 1
      %p90 = por %p88, %p89
      %p92 = scmp.ne.s32.totalorder %s75, %s91
      %p93 = scmp.eq.s32.totalorder %s27, 0
      %p94 = por %p92, %p93
      %s96 = sadd.s32 %s95, 1
      %p99 = scmp.eq.s32.totalorder %s21, 1
      %p100 = scmp.ne.s32.totalorder %s95, %s97
      %p101 = scmp.eq.s32.totalorder %s21, 0
      %p102 = por %p100, %p101
      %p103 = scmp.ne.s32.totalorder %s95, %s97
      %p104 = scmp.eq.s32.totalorder %s26, 1
      %p105 = por %p103, %p104
      %p106 = scmp.ne.s32.totalorder %s97, %s98
      %p107 = scmp.eq.s32.totalorder %s26, 0
      %p108 = por %p106, %p107
      %p109 = scmp.ne.s32.totalorder %s97, %s98
      %p110 = scmp.eq.s32.totalorder %s27, 1
      %p111 = por %p109, %p110
      %p113 = scmp.ne.s32.totalorder %s98, %s112
      %p114 = scmp.eq.s32.totalorder %s27, 0
      %p115 = por %p113, %p114
      %s117 = sadd.s32 %s116, 1
      %p120 = scmp.eq.s32.totalorder %s21, 1
      %p121 = scmp.ne.s32.totalorder %s116, %s118
      %p122 = scmp.eq.s32.totalorder %s21, 0
      %p123 = por %p121, %p122
      %p124 = scmp.ne.s32.totalorder %s116, %s118
      %p125 = scmp.eq.s32.totalorder %s26, 1
      %p126 = por %p124, %p125
      %p127 = scmp.ne.s32.totalorder %s118, %s119
      %p128 = scmp.eq.s32.totalorder %s26, 0
      %p129 = por %p127, %p128
      %p130 = scmp.ne.s32.totalorder %s118, %s119
      %p131 = scmp.eq.s32.totalorder %s27, 1
      %p132 = por %p130, %p131
      %p134 = scmp.ne.s32.totalorder %s119, %s133
      %p135 = scmp.eq.s32.totalorder %s27, 0
      %p136 = por %p134, %p135
      %s138 = sadd.s32 %s137, 1
      %p141 = scmp.eq.s32.totalorder %s21, 1
      %p142 = scmp.ne.s32.totalorder %s137, %s139
      %p143 = scmp.eq.s32.totalorder %s21, 0
      %p144 = por %p142, %p143
      %p145 = scmp.ne.s32.totalorder %s137, %s139
      %p146 = scmp.eq.s32.totalorder %s26, 1
      %p147 = por %p145, %p146
      %p148 = scmp.ne.s32.totalorder %s139, %s140
      %p149 = scmp.eq.s32.totalorder %s26, 0
      %p150 = por %p148, %p149
      %p151 = scmp.ne.s32.totalorder %s139, %s140
      %p152 = scmp.eq.s32.totalorder %s27, 1
      %p153 = por %p151, %p152
      %p155 = scmp.ne.s32.totalorder %s140, %s154
      %p156 = scmp.eq.s32.totalorder %s27, 0
      %p157 = por %p155, %p156
      %s159 = sadd.s32 %s158, 1
      %p162 = scmp.eq.s32.totalorder %s21, 1
      %p163 = scmp.ne.s32.totalorder %s158, %s160
      %p164 = scmp.eq.s32.totalorder %s21, 0
      %p165 = por %p163, %p164
      %p166 = scmp.ne.s32.totalorder %s158, %s160
      %p167 = scmp.eq.s32.totalorder %s26, 1
      %p168 = por %p166, %p167
      %p169 = scmp.ne.s32.totalorder %s160, %s161
      %p170 = scmp.eq.s32.totalorder %s26, 0
      %p171 = por %p169, %p170
      %p172 = scmp.ne.s32.totalorder %s160, %s161
      %p173 = scmp.eq.s32.totalorder %s27, 1
      %p174 = por %p172, %p173
      %p176 = scmp.ne.s32.totalorder %s161, %s175
      %p177 = scmp.eq.s32.totalorder %s27, 0
      %p178 = por %p176, %p177
      %s179 = ssub.s32 %s28, %s40
      %s180 = ssub.s32 %s29, %s36
      %s181 = sor.u32 %s179, %s180
      %p182 = scmp.eq.s32.totalorder %s181, 0
      %s184 = sadd.s32 %s183, 1
      %s185 = scalar_select %p182, %s183, %s184
      %p188 = pneg %p182
      %p189 = scmp.eq.s32.totalorder %s21, 1
      %p190 = por %p188, %p189
      %p191 = scmp.ne.s32.totalorder %s183, %s186
      %p192 = scmp.eq.s32.totalorder %s21, 0
      %p193 = por %p191, %p192
      %p194 = scmp.ne.s32.totalorder %s183, %s186
      %p195 = scmp.eq.s32.totalorder %s26, 1
      %p196 = por %p194, %p195
      %p197 = scmp.ne.s32.totalorder %s186, %s187
      %p198 = scmp.eq.s32.totalorder %s26, 0
      %p199 = por %p197, %p198
      %p200 = scmp.ne.s32.totalorder %s186, %s187
      %p201 = scmp.eq.s32.totalorder %s27, 1
      %p202 = por %p200, %p201
      %p204 = scmp.ne.s32.totalorder %s187, %s203
      %p205 = scmp.eq.s32.totalorder %s27, 0
      %p206 = por %p204, %p205
      %p207 = scmp.le.s32.totalorder 1, %s21
      %p208 = scmp.lt.s32.totalorder %s21, 3
      %p209 = pnand %p207, %p208
      %p210 = pneg %p209
      // Predicated region
      $region9: #{tpu_custom_call.1} parent=5 // pred_check
        _
      $region10: #{tpu_custom_call.1} parent=5 // pred_check_branch
        %212 = sbr.rel (%p209) target = $region12
      $region11: #{tpu_custom_call.1} parent=5 // pred_region
        %s213 = ssub.s32 %s21, 1
        // Predicated region
        $region13: #{tpu_custom_call.1} parent=11 // pred_check
          %p214 = pneg %p108
        $region14: #{tpu_custom_call.1} parent=11 // pred_check_branch
          %216 = sbr.rel (%p214) target = $region16
        $region15: #{tpu_custom_call.1} parent=11 // pred_region
          %s218 = ssub.s32 128, 128
          %219 = vsyncadd [#allocation6], %s218
          %s220 = sshll.u32 [#allocation7], 4
          %s221 = int_to_ptr.vmem [resolvable:$true] %s220
          %226 = dma.hbm_to_vmem [thread:$0]  %s2, 128, %s221, [#allocation6], 64, 64, 4
        $region16: #{tpu_custom_call.1} parent=11 // pred_fallthru
          _
        // Predicated region
        $region17: #{tpu_custom_call.1} parent=11 // pred_check
          %p227 = pneg %p129
        $region18: #{tpu_custom_call.1} parent=11 // pred_check_branch
          %229 = sbr.rel (%p227) target = $region20
        $region19: #{tpu_custom_call.1} parent=11 // pred_region
          _
        $region20: #{tpu_custom_call.1} parent=11 // pred_fallthru
          _
        // Predicated region
        $region21: #{tpu_custom_call.1} parent=11 // pred_check
          %p230 = pneg %p150
        $region22: #{tpu_custom_call.1} parent=11 // pred_check_branch
          %232 = sbr.rel (%p230) target = $region24
        $region23: #{tpu_custom_call.1} parent=11 // pred_region
          _
        $region24: #{tpu_custom_call.1} parent=11 // pred_fallthru
          _
        // Predicated region
        $region25: #{tpu_custom_call.1} parent=11 // pred_check
          %p233 = pneg %p171
        $region26: #{tpu_custom_call.1} parent=11 // pred_check_branch
          %235 = sbr.rel (%p233) target = $region28
        $region27: #{tpu_custom_call.1} parent=11 // pred_region
          _
        $region28: #{tpu_custom_call.1} parent=11 // pred_fallthru
          _
      $region12: #{tpu_custom_call.1} parent=5 // pred_fallthru
        _
      %p236 = scmp.lt.s32.totalorder %s21, 2
      // Predicated region
      $region29: #{tpu_custom_call.1} parent=5 // pred_check
        %p237 = pneg %p236
      $region30: #{tpu_custom_call.1} parent=5 // pred_check_branch
        %239 = sbr.rel (%p237) target = $region32
      $region31: #{tpu_custom_call.1} parent=5 // pred_region
        // Predicated region
        $region33: #{tpu_custom_call.1} parent=31 // pred_check
          %p240 = pneg %p55
        $region34: #{tpu_custom_call.1} parent=31 // pred_check_branch
          %242 = sbr.rel (%p240) target = $region36
        $region35: #{tpu_custom_call.1} parent=31 // pred_region
          %s243 = sand.u32 %s45, 1
          %s244 = scalar_lea.sflag [#allocation3], %s243
          %s245 = sand.u32 %s45, 1
          %s246 = smul.addr %s245, 16
          %s247 = scalar_lea.vmem [#allocation2], %s246
          %s249 = ssub.s32 256, 256
          %250 = vsyncadd %s244, %s249
          %s251 = smul.addr %s28, 2
          %s252 = sadd.s32 %s29, %s251
          %s253 = smul.addr %s252, 128
          %s254 = scalar_lea.hbm %s0, %s253
          %s255 = sshll.u32 %s247, 4
          %s256 = int_to_ptr.vmem [resolvable:$true] %s255
          %261 = dma.hbm_to_vmem [thread:$0]  %s254, 256, %s256, %s244, 128, 128, 8
        $region36: #{tpu_custom_call.1} parent=31 // pred_fallthru
          _
        // Predicated region
        $region37: #{tpu_custom_call.1} parent=31 // pred_check
          %p262 = pneg %p81
        $region38: #{tpu_custom_call.1} parent=31 // pred_check_branch
          %264 = sbr.rel (%p262) target = $region40
        $region39: #{tpu_custom_call.1} parent=31 // pred_region
          %s265 = sand.u32 %s21, 1
          %s266 = scalar_lea.sflag [#allocation6], %s265
          %s267 = sand.u32 %s71, 1
          %s268 = smul.addr %s267, 8
          %s269 = scalar_lea.vmem [#allocation5], %s268
          %s271 = ssub.s32 128, 128
          %272 = vsyncadd %s266, %s271
          %s273 = smul.addr %s28, 128
          %s274 = scalar_lea.hbm %s1, %s273
          %s276 = sshll.u32 %s269, 4
          %s277 = int_to_ptr.vmem [resolvable:$true] %s276
          %279 = dma.hbm_to_vmem [thread:$0]  %s274, 128, %s277, %s266
        $region40: #{tpu_custom_call.1} parent=31 // pred_fallthru
          _
      $region32: #{tpu_custom_call.1} parent=5 // pred_fallthru
        _
      %p280 = scmp.le.s32.totalorder 1, %s21
      %p281 = scmp.lt.s32.totalorder %s21, 3
      %p282 = pnand %p280, %p281
      %p283 = pneg %p282
      // Predicated region
      $region41: #{tpu_custom_call.1} parent=5 // pred_check
        _
      $region42: #{tpu_custom_call.1} parent=5 // pred_check_branch
        %285 = sbr.rel (%p282) target = $region44
      $region43: #{tpu_custom_call.1} parent=5 // pred_region
        %s286 = ssub.s32 %s21, 1
        %s287 = sand.u32 %s48, 1
        %s288 = scalar_lea.sflag [#allocation3], %s287
        %s289 = sand.u32 %s48, 1
        %s290 = smul.addr %s289, 16
        %s291 = scalar_lea.vmem [#allocation2], %s290
        // Predicated region
        $region45: #{tpu_custom_call.1} parent=43 // pred_check
          %p292 = pneg %p61
        $region46: #{tpu_custom_call.1} parent=43 // pred_check_branch
          %294 = sbr.rel (%p292) target = $region48
        $region47: #{tpu_custom_call.1} parent=43 // pred_region
          %295 = dma.done %s288, 256
        $region48: #{tpu_custom_call.1} parent=43 // pred_fallthru
          _
        %s296 = sand.u32 %s26, 1
        %s297 = scalar_lea.sflag [#allocation6], %s296
        %s298 = sand.u32 %s74, 1
        %s299 = smul.addr %s298, 8
        %s300 = scalar_lea.vmem [#allocation5], %s299
        // Predicated region
        $region49: #{tpu_custom_call.1} parent=43 // pred_check
          %p301 = pneg %p87
        $region50: #{tpu_custom_call.1} parent=43 // pred_check_branch
          %303 = sbr.rel (%p301) target = $region52
        $region51: #{tpu_custom_call.1} parent=43 // pred_region
          %304 = dma.done %s297, 128
        $region52: #{tpu_custom_call.1} parent=43 // pred_fallthru
          _
        // Predicated region
        $region53: #{tpu_custom_call.1} parent=43 // pred_check
          %p305 = pneg %p108
        $region54: #{tpu_custom_call.1} parent=43 // pred_check_branch
          %307 = sbr.rel (%p305) target = $region56
        $region55: #{tpu_custom_call.1} parent=43 // pred_region
          %308 = dma.done [#allocation6], 128
        $region56: #{tpu_custom_call.1} parent=43 // pred_fallthru
          _
        %s309 = sand.u32 %s48, 1
        %s310 = scalar_lea.sflag [#allocation3], %s309
        %s311 = sand.u32 %s48, 1
        %s312 = smul.addr %s311, 16
        %s313 = scalar_lea.vmem [#allocation2], %s312
        %p314 = pneg %p61
        %p315 = pneg %p58
        %s316 = sand.u32 %s26, 1
        %s317 = scalar_lea.sflag [#allocation6], %s316
        %s318 = sand.u32 %s74, 1
        %s319 = smul.addr %s318, 8
        %s320 = scalar_lea.vmem [#allocation5], %s319
        %p321 = pneg %p87
        %p322 = pneg %p84
        %p323 = pneg %p108
        %p324 = pneg %p105
        %p325 = pneg %p129
        %p326 = pneg %p126
        %p327 = pneg %p150
        %p328 = pneg %p147
        %p329 = pneg %p171
        %p330 = pneg %p168
        %p331 = pneg %p199
        %p332 = pneg %p196
        %s333 = sand.u32 %s186, 1
        %s334 = scalar_lea.sflag [#allocation4], %s333
        %s335 = sand.u32 %s186, 1
        %s336 = smul.addr %s335, 128
        %s337 = scalar_lea.vmem [#allocation8], %s336
        %s338 = smul.u32 16, %s31
        %v340 = vld [vmem:[%s291] sm:$0xff]
        %v341 = vld [vmem:[%s291 + $0x8] sm:$0xff]
        %v342 = vpack.c.bf16 %v341, %v340
        %v343 = vld [vmem:[%s300] sm:$0xff]
        %v344 = vpack.c.bf16 %v343, %v343
        %v345 = vld [vmem:[#allocation7] sm:$0xf]
        %v346 = vld [vmem:[#allocation7 + $0x4] sm:$0xf]
        %v347 = vld [vmem:[%s4] sm:$0x1]
        %v349 = vlaneseq
        %v350 = vshrl.u32 %v349, 7
        %v351 = vsub.s32 0, %v350
        %v352 = vrot.slane %v347, %v351
        %354 = vxpose.xlu0.c.b16.start [1/8] %v342, 128
        %355 = vxpose.xlu0.c.b16.cont [2/8] 0, 128
        %356 = vxpose.xlu0.c.b16.cont [3/8] 0, 128
        %357 = vxpose.xlu0.c.b16.cont [4/8] 0, 128
        %358 = vxpose.xlu0.c.b16.cont [5/8] 0, 128
        %359 = vxpose.xlu0.c.b16.cont [6/8] 0, 128
        %360 = vxpose.xlu0.c.b16.cont [7/8] 0, 128
        %361 = vxpose.xlu0.c.b16.end [8/8] 0, 128
        %v362 = vpop.trf.xlu0
        %v363 = vpop.trf.xlu0
        %v364 = vpop.trf.xlu0
        %v365 = vpop.trf.xlu0
        %v366 = vpop.trf.xlu0
        %v367 = vpop.trf.xlu0
        %v368 = vpop.trf.xlu0
        %v369 = vpop.trf.xlu0
        %v372 = vunpack.c.l.b16 %v345
        %v373 = vunpack.c.l.b16 %v346
        %v374 = vpack.c.b16 %v373, %v372
        %vm376 = vcmask 130048
        %v378 = vsel %vm376, %v362, 0
        %v381 = vsel %vm376, %v363, 0
        %v384 = vsel %vm376, %v364, 0
        %v387 = vsel %vm376, %v365, 0
        %v390 = vsel %vm376, %v366, 0
        %v393 = vsel %vm376, %v367, 0
        %v396 = vsel %vm376, %v368, 0
        %v399 = vsel %vm376, %v369, 0
        %401 = vmatprep.subr.bf16.mxu0 0
        %402 = vmatpush1.bf16.msra.mxu0 %v374
        %403 = vmatprep.subr.bf16.mxu0 0
        %404 = vmatpush1.bf16.msra.mxu0 0
        %405 = vmatprep.subr.bf16.mxu0 0
        %406 = vmatpush1.bf16.msra.mxu0 0
        %407 = vmatprep.subr.bf16.mxu0 0
        %408 = vmatpush1.bf16.msra.mxu0 0
        %409 = vmatprep.subr.bf16.mxu0 0
        %410 = vmatpush1.bf16.msra.mxu0 0
        %411 = vmatprep.subr.bf16.mxu0 0
        %412 = vmatpush1.bf16.msra.mxu0 0
        %413 = vmatprep.subr.bf16.mxu0 0
        %414 = vmatpush1.bf16.msra.mxu0 0
        %415 = vmatprep.subr.bf16.mxu0 0
        %416 = vmatpush1.bf16.msra.mxu0 0
        %417 = vmatprep.subr.bf16.mxu0 0
        %418 = vmatpush1.bf16.msra.mxu0 0
        %419 = vmatprep.subr.bf16.mxu0 0
        %420 = vmatpush1.bf16.msra.mxu0 0
        %421 = vmatprep.subr.bf16.mxu0 0
        %422 = vmatpush1.bf16.msra.mxu0 0
        %423 = vmatprep.subr.bf16.mxu0 0
        %424 = vmatpush1.bf16.msra.mxu0 0
        %425 = vmatprep.subr.bf16.mxu0 0
        %426 = vmatpush1.bf16.msra.mxu0 0
        %427 = vmatprep.subr.bf16.mxu0 0
        %428 = vmatpush1.bf16.msra.mxu0 0
        %429 = vmatprep.subr.bf16.mxu0 0
        %430 = vmatpush1.bf16.msra.mxu0 0
        %431 = vmatprep.subr.bf16.mxu0 0
        %432 = vmatpush1.bf16.msra.mxu0 0
        %433 = vmatprep.mubr.bf16.mxu0 0
        %434 = vmatmul.mubr.bf16.gmra.mrb[0].mxu0 %v378
        %v435 = vpop.f32.mrb[0].mxu0
        %v436 = vadd.f32 %v352, %v435
        %v437 = vpop.f32.mrb[0].mxu0
        %v438 = vpop.f32.mrb[0].mxu0
        %v439 = vadd.f32 %v352, %v438
        %v440 = vpop.f32.mrb[0].mxu0
        %441 = vmatprep.mubr.bf16.mxu0 0
        %442 = vmatmul.mubr.bf16.gmra.mrb[0].mxu0 %v381
        %v443 = vpop.f32.mrb[0].mxu0
        %v444 = vadd.f32 %v352, %v443
        %v445 = vpop.f32.mrb[0].mxu0
        %v446 = vpop.f32.mrb[0].mxu0
        %v447 = vadd.f32 %v352, %v446
        %v448 = vpop.f32.mrb[0].mxu0
        %449 = vmatprep.mubr.bf16.mxu0 0
        %450 = vmatmul.mubr.bf16.gmra.mrb[0].mxu0 %v384
        %v451 = vpop.f32.mrb[0].mxu0
        %v452 = vadd.f32 %v352, %v451
        %v453 = vpop.f32.mrb[0].mxu0
        %v454 = vpop.f32.mrb[0].mxu0
        %v455 = vadd.f32 %v352, %v454
        %v456 = vpop.f32.mrb[0].mxu0
        %457 = vmatprep.mubr.bf16.mxu0 0
        %458 = vmatmul.mubr.bf16.gmra.mrb[0].mxu0 %v387
        %v459 = vpop.f32.mrb[0].mxu0
        %v460 = vadd.f32 %v352, %v459
        %v461 = vpop.f32.mrb[0].mxu0
        %v462 = vpop.f32.mrb[0].mxu0
        %v463 = vadd.f32 %v352, %v462
        %v464 = vpop.f32.mrb[0].mxu0
        %465 = vmatprep.mubr.bf16.mxu0 0
        %466 = vmatmul.mubr.bf16.gmra.mrb[0].mxu0 %v390
        %v467 = vpop.f32.mrb[0].mxu0
        %v468 = vadd.f32 %v352, %v467
        %v469 = vpop.f32.mrb[0].mxu0
        %v470 = vpop.f32.mrb[0].mxu0
        %v471 = vadd.f32 %v352, %v470
        %v472 = vpop.f32.mrb[0].mxu0
        %473 = vmatprep.mubr.bf16.mxu0 0
        %474 = vmatmul.mubr.bf16.gmra.mrb[0].mxu0 %v393
        %v475 = vpop.f32.mrb[0].mxu0
        %v476 = vadd.f32 %v352, %v475
        %v477 = vpop.f32.mrb[0].mxu0
        %v478 = vpop.f32.mrb[0].mxu0
        %v479 = vadd.f32 %v352, %v478
        %v480 = vpop.f32.mrb[0].mxu0
        %481 = vmatprep.mubr.bf16.mxu0 0
        %482 = vmatmul.mubr.bf16.gmra.mrb[0].mxu0 %v396
        %v483 = vpop.f32.mrb[0].mxu0
        %v484 = vadd.f32 %v352, %v483
        %v485 = vpop.f32.mrb[0].mxu0
        %v486 = vpop.f32.mrb[0].mxu0
        %v487 = vadd.f32 %v352, %v486
        %v488 = vpop.f32.mrb[0].mxu0
        %489 = vmatprep.mubr.bf16.mxu0 0
        %490 = vmatmul.mubr.bf16.gmra.mrb[0].mxu0 %v399
        %v491 = vpop.f32.mrb[0].mxu0
        %v492 = vadd.f32 %v352, %v491
        %v493 = vpop.f32.mrb[0].mxu0
        %v494 = vpop.f32.mrb[0].mxu0
        %v495 = vadd.f32 %v352, %v494
        %v496 = vpop.f32.mrb[0].mxu0
        %497 = vdwg.mxu0
        %v498 = vpack.c.bf16 %v439, %v436
        %v499 = vpack.c.bf16 %v447, %v444
        %v500 = vpack.c.bf16 %v455, %v452
        %v501 = vpack.c.bf16 %v463, %v460
        %v502 = vpack.c.bf16 %v471, %v468
        %v503 = vpack.c.bf16 %v479, %v476
        %v504 = vpack.c.bf16 %v487, %v484
        %v505 = vpack.c.bf16 %v495, %v492
        %v506 = vld [vmem:[%s3] sm:$0xff]
        %v507 = vld [vmem:[%s5] sm:$0x3]
        %v509 = vlaneseq
        %v510 = vshrl.u32 %v509, 7
        %v511 = vsub.s32 0, %v510
        %v512 = vrot.slane %v507, %v511
        %v513 = vlaneseq
        %v514 = vshrl.u32 %v513, 7
        %v515 = vsub.s32 1, %v514
        %v516 = vrot.slane %v507, %v515
        %519 = vxpose.xlu0.c.b16.start [1/8] %v344, 128
        %520 = vxpose.xlu0.c.b16.cont [2/8] 0, 128
        %521 = vxpose.xlu0.c.b16.cont [3/8] 0, 128
        %522 = vxpose.xlu0.c.b16.cont [4/8] 0, 128
        %523 = vxpose.xlu0.c.b16.cont [5/8] 0, 128
        %524 = vxpose.xlu0.c.b16.cont [6/8] 0, 128
        %525 = vxpose.xlu0.c.b16.cont [7/8] 0, 128
        %526 = vxpose.xlu0.c.b16.end [8/8] 0, 128
        %v527 = vpop.trf.xlu0
        %v528 = vpop.trf.xlu0
        %v529 = vpop.trf.xlu0
        %v530 = vpop.trf.xlu0
        %v531 = vpop.trf.xlu0
        %v532 = vpop.trf.xlu0
        %v533 = vpop.trf.xlu0
        %v534 = vpop.trf.xlu0
        %v536 = vunpack.c.l.b16 %v506
        %v537 = vunpack.c.h.b16 %v506
        %v538 = vpack.c.b16 %v536, %v536
        %v539 = vpack.c.b16 %v537, %v537
        %vm540 = vcmask 64512
        %v542 = vsel %vm540, %v527, 0
        %v545 = vsel %vm540, %v528, 0
        %v548 = vsel %vm540, %v529, 0
        %v551 = vsel %vm540, %v530, 0
        %v554 = vsel %vm540, %v531, 0
        %v557 = vsel %vm540, %v532, 0
        %v560 = vsel %vm540, %v533, 0
        %v563 = vsel %vm540, %v534, 0
        %vm565 = vcmask 1043456
        %v567 = vsel %vm565, %v538, 0
        %v570 = vsel %vm565, %v539, 0
        %572 = vmatprep.subr.bf16.mxu0 %v570
        %573 = vmatpush1.bf16.msra.mxu0 %v567
        %574 = vmatprep.subr.bf16.mxu0 0
        %575 = vmatpush1.bf16.msra.mxu0 0
        %576 = vmatprep.subr.bf16.mxu0 0
        %577 = vmatpush1.bf16.msra.mxu0 0
        %578 = vmatprep.subr.bf16.mxu0 0
        %579 = vmatpush1.bf16.msra.mxu0 0
        %580 = vmatprep.subr.bf16.mxu0 0
        %581 = vmatpush1.bf16.msra.mxu0 0
        %582 = vmatprep.subr.bf16.mxu0 0
        %583 = vmatpush1.bf16.msra.mxu0 0
        %584 = vmatprep.subr.bf16.mxu0 0
        %585 = vmatpush1.bf16.msra.mxu0 0
        %586 = vmatprep.subr.bf16.mxu0 0
        %587 = vmatpush1.bf16.msra.mxu0 0
        %588 = vmatprep.subr.bf16.mxu0 0
        %589 = vmatpush1.bf16.msra.mxu0 0
        %590 = vmatprep.subr.bf16.mxu0 0
        %591 = vmatpush1.bf16.msra.mxu0 0
        %592 = vmatprep.subr.bf16.mxu0 0
        %593 = vmatpush1.bf16.msra.mxu0 0
        %594 = vmatprep.subr.bf16.mxu0 0
        %595 = vmatpush1.bf16.msra.mxu0 0
        %596 = vmatprep.subr.bf16.mxu0 0
        %597 = vmatpush1.bf16.msra.mxu0 0
        %598 = vmatprep.subr.bf16.mxu0 0
        %599 = vmatpush1.bf16.msra.mxu0 0
        %600 = vmatprep.subr.bf16.mxu0 0
        %601 = vmatpush1.bf16.msra.mxu0 0
        %602 = vmatprep.subr.bf16.mxu0 0
        %603 = vmatpush1.bf16.msra.mxu0 0
        %604 = vmatprep.mubr.bf16.mxu0 0
        %605 = vmatmul.mubr.bf16.gmra.mrb[0].mxu0 %v542
        %v606 = vpop.f32.mrb[0].mxu0
        %v607 = vadd.f32 %v512, %v606
        %v608 = vpop.f32.mrb[0].mxu0
        %v609 = vadd.f32 %v516, %v608
        %v610 = vpop.f32.mrb[0].mxu0
        %v611 = vadd.f32 %v512, %v610
        %v612 = vpop.f32.mrb[0].mxu0
        %v613 = vadd.f32 %v516, %v612
        %614 = vmatprep.mubr.bf16.mxu0 0
        %615 = vmatmul.mubr.bf16.gmra.mrb[0].mxu0 %v545
        %v616 = vpop.f32.mrb[0].mxu0
        %v617 = vadd.f32 %v512, %v616
        %v618 = vpop.f32.mrb[0].mxu0
        %v619 = vadd.f32 %v516, %v618
        %v620 = vpop.f32.mrb[0].mxu0
        %v621 = vadd.f32 %v512, %v620
        %v622 = vpop.f32.mrb[0].mxu0
        %v623 = vadd.f32 %v516, %v622
        %624 = vmatprep.mubr.bf16.mxu0 0
        %625 = vmatmul.mubr.bf16.gmra.mrb[0].mxu0 %v548
        %v626 = vpop.f32.mrb[0].mxu0
        %v627 = vadd.f32 %v512, %v626
        %v628 = vpop.f32.mrb[0].mxu0
        %v629 = vadd.f32 %v516, %v628
        %v630 = vpop.f32.mrb[0].mxu0
        %v631 = vadd.f32 %v512, %v630
        %v632 = vpop.f32.mrb[0].mxu0
        %v633 = vadd.f32 %v516, %v632
        %634 = vmatprep.mubr.bf16.mxu0 0
        %635 = vmatmul.mubr.bf16.gmra.mrb[0].mxu0 %v551
        %v636 = vpop.f32.mrb[0].mxu0
        %v637 = vadd.f32 %v512, %v636
        %v638 = vpop.f32.mrb[0].mxu0
        %v639 = vadd.f32 %v516, %v638
        %v640 = vpop.f32.mrb[0].mxu0
        %v641 = vadd.f32 %v512, %v640
        %v642 = vpop.f32.mrb[0].mxu0
        %v643 = vadd.f32 %v516, %v642
        %644 = vmatprep.mubr.bf16.mxu0 0
        %645 = vmatmul.mubr.bf16.gmra.mrb[0].mxu0 %v554
        %v646 = vpop.f32.mrb[0].mxu0
        %v647 = vadd.f32 %v512, %v646
        %v648 = vpop.f32.mrb[0].mxu0
        %v649 = vadd.f32 %v516, %v648
        %v650 = vpop.f32.mrb[0].mxu0
        %v651 = vadd.f32 %v512, %v650
        %v652 = vpop.f32.mrb[0].mxu0
        %v653 = vadd.f32 %v516, %v652
        %654 = vmatprep.mubr.bf16.mxu0 0
        %655 = vmatmul.mubr.bf16.gmra.mrb[0].mxu0 %v557
        %v656 = vpop.f32.mrb[0].mxu0
        %v657 = vadd.f32 %v512, %v656
        %v658 = vpop.f32.mrb[0].mxu0
        %v659 = vadd.f32 %v516, %v658
        %v660 = vpop.f32.mrb[0].mxu0
        %v661 = vadd.f32 %v512, %v660
        %v662 = vpop.f32.mrb[0].mxu0
        %v663 = vadd.f32 %v516, %v662
        %664 = vmatprep.mubr.bf16.mxu0 0
        %665 = vmatmul.mubr.bf16.gmra.mrb[0].mxu0 %v560
        %v666 = vpop.f32.mrb[0].mxu0
        %v667 = vadd.f32 %v512, %v666
        %v668 = vpop.f32.mrb[0].mxu0
        %v669 = vadd.f32 %v516, %v668
        %v670 = vpop.f32.mrb[0].mxu0
        %v671 = vadd.f32 %v512, %v670
        %v672 = vpop.f32.mrb[0].mxu0
        %v673 = vadd.f32 %v516, %v672
        %674 = vmatprep.mubr.bf16.mxu0 0
        %675 = vmatmul.mubr.bf16.gmra.mrb[0].mxu0 %v563
        %v676 = vpop.f32.mrb[0].mxu0
        %v677 = vadd.f32 %v512, %v676
        %v678 = vpop.f32.mrb[0].mxu0
        %v679 = vadd.f32 %v516, %v678
        %v680 = vpop.f32.mrb[0].mxu0
        %v681 = vadd.f32 %v512, %v680
        %v682 = vpop.f32.mrb[0].mxu0
        %v683 = vadd.f32 %v516, %v682
        %684 = vdwg.mxu0
        %v685 = vpack.c.bf16 %v611, %v607
        %v686 = vpack.c.bf16 %v613, %v609
        %v687 = vpack.c.bf16 %v621, %v617
        %v688 = vpack.c.bf16 %v623, %v619
        %v689 = vpack.c.bf16 %v631, %v627
        %v690 = vpack.c.bf16 %v633, %v629
        %v691 = vpack.c.bf16 %v641, %v637
        %v692 = vpack.c.bf16 %v643, %v639
        %v693 = vpack.c.bf16 %v651, %v647
        %v694 = vpack.c.bf16 %v653, %v649
        %v695 = vpack.c.bf16 %v661, %v657
        %v696 = vpack.c.bf16 %v663, %v659
        %v697 = vpack.c.bf16 %v671, %v667
        %v698 = vpack.c.bf16 %v673, %v669
        %v699 = vpack.c.bf16 %v681, %v677
        %v700 = vpack.c.bf16 %v683, %v679
        %701 = vmatprep.subr.bf16.mxu0 0
        %702 = vmatpush1.bf16.xpose.msra.mxu0 %v685
        %703 = vmatprep.subr.bf16.mxu0 0
        %704 = vmatpush1.bf16.xpose.msra.mxu0 %v687
        %705 = vmatprep.subr.bf16.mxu0 0
        %706 = vmatpush1.bf16.xpose.msra.mxu0 %v689
        %707 = vmatprep.subr.bf16.mxu0 0
        %708 = vmatpush1.bf16.xpose.msra.mxu0 %v691
        %709 = vmatprep.subr.bf16.mxu0 0
        %710 = vmatpush1.bf16.xpose.msra.mxu0 %v693
        %711 = vmatprep.subr.bf16.mxu0 0
        %712 = vmatpush1.bf16.xpose.msra.mxu0 %v695
        %713 = vmatprep.subr.bf16.mxu0 0
        %714 = vmatpush1.bf16.xpose.msra.mxu0 %v697
        %715 = vmatprep.subr.bf16.mxu0 0
        %716 = vmatpush1.bf16.xpose.msra.mxu0 %v699
        %717 = vmatprep.subr.bf16.mxu0 0
        %718 = vmatpush1.bf16.xpose.msra.mxu0 0
        %719 = vmatprep.subr.bf16.mxu0 0
        %720 = vmatpush1.bf16.xpose.msra.mxu0 0
        %721 = vmatprep.subr.bf16.mxu0 0
        %722 = vmatpush1.bf16.xpose.msra.mxu0 0
        %723 = vmatprep.subr.bf16.mxu0 0
        %724 = vmatpush1.bf16.xpose.msra.mxu0 0
        %725 = vmatprep.subr.bf16.mxu0 0
        %726 = vmatpush1.bf16.xpose.msra.mxu0 0
        %727 = vmatprep.subr.bf16.mxu0 0
        %728 = vmatpush1.bf16.xpose.msra.mxu0 0
        %729 = vmatprep.subr.bf16.mxu0 0
        %730 = vmatpush1.bf16.xpose.msra.mxu0 0
        %731 = vmatprep.subr.bf16.mxu0 0
        %732 = vmatpush1.bf16.xpose.msra.mxu0 0
        %733 = vmatprep.mubr.bf16.mxu0 0
        %734 = vmatmul.mubr.bf16.gmra.mrb[0].mxu0 %v498
        %v735 = vpop.f32.mrb[0].mxu0
        %v736 = vadd.f32 0.0, %v735
        %v737 = vpop.f32.mrb[0].mxu0
        %v738 = vpop.f32.mrb[0].mxu0
        %v739 = vadd.f32 0.0, %v738
        %v740 = vpop.f32.mrb[0].mxu0
        %741 = vmatprep.mubr.bf16.mxu0 0
        %742 = vmatmul.mubr.bf16.gmra.mrb[0].mxu0 %v499
        %v743 = vpop.f32.mrb[0].mxu0
        %v744 = vadd.f32 0.0, %v743
        %v745 = vpop.f32.mrb[0].mxu0
        %v746 = vpop.f32.mrb[0].mxu0
        %v747 = vadd.f32 0.0, %v746
        %v748 = vpop.f32.mrb[0].mxu0
        %749 = vmatprep.mubr.bf16.mxu0 0
        %750 = vmatmul.mubr.bf16.gmra.mrb[0].mxu0 %v500
        %v751 = vpop.f32.mrb[0].mxu0
        %v752 = vadd.f32 0.0, %v751
        %v753 = vpop.f32.mrb[0].mxu0
        %v754 = vpop.f32.mrb[0].mxu0
        %v755 = vadd.f32 0.0, %v754
        %v756 = vpop.f32.mrb[0].mxu0
        %757 = vmatprep.mubr.bf16.mxu0 0
        %758 = vmatmul.mubr.bf16.gmra.mrb[0].mxu0 %v501
        %v759 = vpop.f32.mrb[0].mxu0
        %v760 = vadd.f32 0.0, %v759
        %v761 = vpop.f32.mrb[0].mxu0
        %v762 = vpop.f32.mrb[0].mxu0
        %v763 = vadd.f32 0.0, %v762
        %v764 = vpop.f32.mrb[0].mxu0
        %765 = vmatprep.mubr.bf16.mxu0 0
        %766 = vmatmul.mubr.bf16.gmra.mrb[0].mxu0 %v502
        %v767 = vpop.f32.mrb[0].mxu0
        %v768 = vadd.f32 0.0, %v767
        %v769 = vpop.f32.mrb[0].mxu0
        %v770 = vpop.f32.mrb[0].mxu0
        %v771 = vadd.f32 0.0, %v770
        %v772 = vpop.f32.mrb[0].mxu0
        %773 = vmatprep.mubr.bf16.mxu0 0
        %774 = vmatmul.mubr.bf16.gmra.mrb[0].mxu0 %v503
        %v775 = vpop.f32.mrb[0].mxu0
        %v776 = vadd.f32 0.0, %v775
        %v777 = vpop.f32.mrb[0].mxu0
        %v778 = vpop.f32.mrb[0].mxu0
        %v779 = vadd.f32 0.0, %v778
        %v780 = vpop.f32.mrb[0].mxu0
        %781 = vmatprep.mubr.bf16.mxu0 0
        %782 = vmatmul.mubr.bf16.gmra.mrb[0].mxu0 %v504
        %v783 = vpop.f32.mrb[0].mxu0
        %v784 = vadd.f32 0.0, %v783
        %v785 = vpop.f32.mrb[0].mxu0
        %v786 = vpop.f32.mrb[0].mxu0
        %v787 = vadd.f32 0.0, %v786
        %v788 = vpop.f32.mrb[0].mxu0
        %789 = vmatprep.mubr.bf16.mxu0 0
        %790 = vmatmul.mubr.bf16.gmra.mrb[0].mxu0 %v505
        %v791 = vpop.f32.mrb[0].mxu0
        %v792 = vadd.f32 0.0, %v791
        %v793 = vpop.f32.mrb[0].mxu0
        %v794 = vpop.f32.mrb[0].mxu0
        %v795 = vadd.f32 0.0, %v794
        %v796 = vpop.f32.mrb[0].mxu0
        %797 = vdwg.mxu0
        %798 = vmax.xlane.f32.xlu0 %v736
        %v799 = vpop.xlane.xlu0 %798
        %800 = vmax.xlane.f32.xlu0 %v739
        %v801 = vpop.xlane.xlu0 %800
        %802 = vmax.xlane.f32.xlu0 %v744
        %v803 = vpop.xlane.xlu0 %802
        %804 = vmax.xlane.f32.xlu0 %v747
        %v805 = vpop.xlane.xlu0 %804
        %806 = vmax.xlane.f32.xlu0 %v752
        %v807 = vpop.xlane.xlu0 %806
        %808 = vmax.xlane.f32.xlu0 %v755
        %v809 = vpop.xlane.xlu0 %808
        %810 = vmax.xlane.f32.xlu0 %v760
        %v811 = vpop.xlane.xlu0 %810
        %812 = vmax.xlane.f32.xlu0 %v763
        %v813 = vpop.xlane.xlu0 %812
        %814 = vmax.xlane.f32.xlu0 %v768
        %v815 = vpop.xlane.xlu0 %814
        %816 = vmax.xlane.f32.xlu0 %v771
        %v817 = vpop.xlane.xlu0 %816
        %818 = vmax.xlane.f32.xlu0 %v776
        %v819 = vpop.xlane.xlu0 %818
        %820 = vmax.xlane.f32.xlu0 %v779
        %v821 = vpop.xlane.xlu0 %820
        %822 = vmax.xlane.f32.xlu0 %v784
        %v823 = vpop.xlane.xlu0 %822
        %824 = vmax.xlane.f32.xlu0 %v787
        %v825 = vpop.xlane.xlu0 %824
        %826 = vmax.xlane.f32.xlu0 %v792
        %v827 = vpop.xlane.xlu0 %826
        %828 = vmax.xlane.f32.xlu0 %v795
        %v829 = vpop.xlane.xlu0 %828
        %v830 = vsub.f32 %v736, %v799
        %v831 = vsub.f32 %v739, %v801
        %v832 = vsub.f32 %v744, %v803
        %v833 = vsub.f32 %v747, %v805
        %v834 = vsub.f32 %v752, %v807
        %v835 = vsub.f32 %v755, %v809
        %v836 = vsub.f32 %v760, %v811
        %v837 = vsub.f32 %v763, %v813
        %v838 = vsub.f32 %v768, %v815
        %v839 = vsub.f32 %v771, %v817
        %v840 = vsub.f32 %v776, %v819
        %v841 = vsub.f32 %v779, %v821
        %v842 = vsub.f32 %v784, %v823
        %v843 = vsub.f32 %v787, %v825
        %v844 = vsub.f32 %v792, %v827
        %v845 = vsub.f32 %v795, %v829
        %v846 = vmul.f32 %v830, 1.442695
        %v847 = vpow.pop %v846
        %v848 = vmul.f32 %v831, 1.442695
        %v849 = vpow.pop %v848
        %v850 = vmul.f32 %v832, 1.442695
        %v851 = vpow.pop %v850
        %v852 = vmul.f32 %v833, 1.442695
        %v853 = vpow.pop %v852
        %v854 = vmul.f32 %v834, 1.442695
        %v855 = vpow.pop %v854
        %v856 = vmul.f32 %v835, 1.442695
        %v857 = vpow.pop %v856
        %v858 = vmul.f32 %v836, 1.442695
        %v859 = vpow.pop %v858
        %v860 = vmul.f32 %v837, 1.442695
        %v861 = vpow.pop %v860
        %v862 = vmul.f32 %v838, 1.442695
        %v863 = vpow.pop %v862
        %v864 = vmul.f32 %v839, 1.442695
        %v865 = vpow.pop %v864
        %v866 = vmul.f32 %v840, 1.442695
        %v867 = vpow.pop %v866
        %v868 = vmul.f32 %v841, 1.442695
        %v869 = vpow.pop %v868
        %v870 = vmul.f32 %v842, 1.442695
        %v871 = vpow.pop %v870
        %v872 = vmul.f32 %v843, 1.442695
        %v873 = vpow.pop %v872
        %v874 = vmul.f32 %v844, 1.442695
        %v875 = vpow.pop %v874
        %v876 = vmul.f32 %v845, 1.442695
        %v877 = vpow.pop %v876
        %878 = vadd.xlane.f32.xlu0 %v847
        %v879 = vpop.xlane.xlu0 %878
        %880 = vadd.xlane.f32.xlu0 %v849
        %v881 = vpop.xlane.xlu0 %880
        %882 = vadd.xlane.f32.xlu0 %v851
        %v883 = vpop.xlane.xlu0 %882
        %884 = vadd.xlane.f32.xlu0 %v853
        %v885 = vpop.xlane.xlu0 %884
        %886 = vadd.xlane.f32.xlu0 %v855
        %v887 = vpop.xlane.xlu0 %886
        %888 = vadd.xlane.f32.xlu0 %v857
        %v889 = vpop.xlane.xlu0 %888
        %890 = vadd.xlane.f32.xlu0 %v859
        %v891 = vpop.xlane.xlu0 %890
        %892 = vadd.xlane.f32.xlu0 %v861
        %v893 = vpop.xlane.xlu0 %892
        %894 = vadd.xlane.f32.xlu0 %v863
        %v895 = vpop.xlane.xlu0 %894
        %896 = vadd.xlane.f32.xlu0 %v865
        %v897 = vpop.xlane.xlu0 %896
        %898 = vadd.xlane.f32.xlu0 %v867
        %v899 = vpop.xlane.xlu0 %898
        %900 = vadd.xlane.f32.xlu0 %v869
        %v901 = vpop.xlane.xlu0 %900
        %902 = vadd.xlane.f32.xlu0 %v871
        %v903 = vpop.xlane.xlu0 %902
        %904 = vadd.xlane.f32.xlu0 %v873
        %v905 = vpop.xlane.xlu0 %904
        %906 = vadd.xlane.f32.xlu0 %v875
        %v907 = vpop.xlane.xlu0 %906
        %908 = vadd.xlane.f32.xlu0 %v877
        %v909 = vpop.xlane.xlu0 %908
        %v910 = vrcp.pop %v879
        %v911 = vrcp.pop %v881
        %v912 = vrcp.pop %v883
        %v913 = vrcp.pop %v885
        %v914 = vrcp.pop %v887
        %v915 = vrcp.pop %v889
        %v916 = vrcp.pop %v891
        %v917 = vrcp.pop %v893
        %v918 = vrcp.pop %v895
        %v919 = vrcp.pop %v897
        %v920 = vrcp.pop %v899
        %v921 = vrcp.pop %v901
        %v922 = vrcp.pop %v903
        %v923 = vrcp.pop %v905
        %v924 = vrcp.pop %v907
        %v925 = vrcp.pop %v909
        %v926 = vmul.f32 %v847, %v910
        %v927 = vmul.f32 %v849, %v911
        %v928 = vmul.f32 %v851, %v912
        %v929 = vmul.f32 %v853, %v913
        %v930 = vmul.f32 %v855, %v914
        %v931 = vmul.f32 %v857, %v915
        %v932 = vmul.f32 %v859, %v916
        %v933 = vmul.f32 %v861, %v917
        %v934 = vmul.f32 %v863, %v918
        %v935 = vmul.f32 %v865, %v919
        %v936 = vmul.f32 %v867, %v920
        %v937 = vmul.f32 %v869, %v921
        %v938 = vmul.f32 %v871, %v922
        %v939 = vmul.f32 %v873, %v923
        %v940 = vmul.f32 %v875, %v924
        %v941 = vmul.f32 %v877, %v925
        %v942 = vpack.c.bf16 %v927, %v926
        %v943 = vpack.c.bf16 %v929, %v928
        %v944 = vpack.c.bf16 %v931, %v930
        %v945 = vpack.c.bf16 %v933, %v932
        %v946 = vpack.c.bf16 %v935, %v934
        %v947 = vpack.c.bf16 %v937, %v936
        %v948 = vpack.c.bf16 %v939, %v938
        %v949 = vpack.c.bf16 %v941, %v940
        %950 = vmatprep.subr.bf16.mxu0 0
        %951 = vmatpush1.bf16.msra.mxu0 %v686
        %952 = vmatprep.subr.bf16.mxu0 0
        %953 = vmatpush1.bf16.msra.mxu0 %v688
        %954 = vmatprep.subr.bf16.mxu0 0
        %955 = vmatpush1.bf16.msra.mxu0 %v690
        %956 = vmatprep.subr.bf16.mxu0 0
        %957 = vmatpush1.bf16.msra.mxu0 %v692
        %958 = vmatprep.subr.bf16.mxu0 0
        %959 = vmatpush1.bf16.msra.mxu0 %v694
        %960 = vmatprep.subr.bf16.mxu0 0
        %961 = vmatpush1.bf16.msra.mxu0 %v696
        %962 = vmatprep.subr.bf16.mxu0 0
        %963 = vmatpush1.bf16.msra.mxu0 %v698
        %964 = vmatprep.subr.bf16.mxu0 0
        %965 = vmatpush1.bf16.msra.mxu0 %v700
        %966 = vmatprep.subr.bf16.mxu0 0
        %967 = vmatpush1.bf16.msra.mxu0 0
        %968 = vmatprep.subr.bf16.mxu0 0
        %969 = vmatpush1.bf16.msra.mxu0 0
        %970 = vmatprep.subr.bf16.mxu0 0
        %971 = vmatpush1.bf16.msra.mxu0 0
        %972 = vmatprep.subr.bf16.mxu0 0
        %973 = vmatpush1.bf16.msra.mxu0 0
        %974 = vmatprep.subr.bf16.mxu0 0
        %975 = vmatpush1.bf16.msra.mxu0 0
        %976 = vmatprep.subr.bf16.mxu0 0
        %977 = vmatpush1.bf16.msra.mxu0 0
        %978 = vmatprep.subr.bf16.mxu0 0
        %979 = vmatpush1.bf16.msra.mxu0 0
        %980 = vmatprep.subr.bf16.mxu0 0
        %981 = vmatpush1.bf16.msra.mxu0 0
        %982 = vmatprep.mubr.bf16.mxu0 0
        %983 = vmatmul.mubr.bf16.gmra.mrb[0].mxu0 %v942
        %v984 = vpop.f32.mrb[0].mxu0
        %v985 = vadd.f32 0.0, %v984
        %v986 = vpop.f32.mrb[0].mxu0
        %v987 = vpop.f32.mrb[0].mxu0
        %v988 = vadd.f32 0.0, %v987
        %v989 = vpop.f32.mrb[0].mxu0
        %990 = vmatprep.mubr.bf16.mxu0 0
        %991 = vmatmul.mubr.bf16.gmra.mrb[0].mxu0 %v943
        %v992 = vpop.f32.mrb[0].mxu0
        %v993 = vadd.f32 0.0, %v992
        %v994 = vpop.f32.mrb[0].mxu0
        %v995 = vpop.f32.mrb[0].mxu0
        %v996 = vadd.f32 0.0, %v995
        %v997 = vpop.f32.mrb[0].mxu0
        %998 = vmatprep.mubr.bf16.mxu0 0
        %999 = vmatmul.mubr.bf16.gmra.mrb[0].mxu0 %v944
        %v1000 = vpop.f32.mrb[0].mxu0
        %v1001 = vadd.f32 0.0, %v1000
        %v1002 = vpop.f32.mrb[0].mxu0
        %v1003 = vpop.f32.mrb[0].mxu0
        %v1004 = vadd.f32 0.0, %v1003
        %v1005 = vpop.f32.mrb[0].mxu0
        %1006 = vmatprep.mubr.bf16.mxu0 0
        %1007 = vmatmul.mubr.bf16.gmra.mrb[0].mxu0 %v945
        %v1008 = vpop.f32.mrb[0].mxu0
        %v1009 = vadd.f32 0.0, %v1008
        %v1010 = vpop.f32.mrb[0].mxu0
        %v1011 = vpop.f32.mrb[0].mxu0
        %v1012 = vadd.f32 0.0, %v1011
        %v1013 = vpop.f32.mrb[0].mxu0
        %1014 = vmatprep.mubr.bf16.mxu0 0
        %1015 = vmatmul.mubr.bf16.gmra.mrb[0].mxu0 %v946
        %v1016 = vpop.f32.mrb[0].mxu0
        %v1017 = vadd.f32 0.0, %v1016
        %v1018 = vpop.f32.mrb[0].mxu0
        %v1019 = vpop.f32.mrb[0].mxu0
        %v1020 = vadd.f32 0.0, %v1019
        %v1021 = vpop.f32.mrb[0].mxu0
        %1022 = vmatprep.mubr.bf16.mxu0 0
        %1023 = vmatmul.mubr.bf16.gmra.mrb[0].mxu0 %v947
        %v1024 = vpop.f32.mrb[0].mxu0
        %v1025 = vadd.f32 0.0, %v1024
        %v1026 = vpop.f32.mrb[0].mxu0
        %v1027 = vpop.f32.mrb[0].mxu0
        %v1028 = vadd.f32 0.0, %v1027
        %v1029 = vpop.f32.mrb[0].mxu0
        %1030 = vmatprep.mubr.bf16.mxu0 0
        %1031 = vmatmul.mubr.bf16.gmra.mrb[0].mxu0 %v948
        %v1032 = vpop.f32.mrb[0].mxu0
        %v1033 = vadd.f32 0.0, %v1032
        %v1034 = vpop.f32.mrb[0].mxu0
        %v1035 = vpop.f32.mrb[0].mxu0
        %v1036 = vadd.f32 0.0, %v1035
        %v1037 = vpop.f32.mrb[0].mxu0
        %1038 = vmatprep.mubr.bf16.mxu0 0
        %1039 = vmatmul.mubr.bf16.gmra.mrb[0].mxu0 %v949
        %v1040 = vpop.f32.mrb[0].mxu0
        %v1041 = vadd.f32 0.0, %v1040
        %v1042 = vpop.f32.mrb[0].mxu0
        %v1043 = vpop.f32.mrb[0].mxu0
        %v1044 = vadd.f32 0.0, %v1043
        %v1045 = vpop.f32.mrb[0].mxu0
        %1046 = vdwg.mxu0
        %1047 = vst [vmem:[%s337] sm:$0xff] %v985
        %1048 = vst [vmem:[%s337 + $0x8] sm:$0xff] %v988
        %1049 = vst [vmem:[%s337 + $0x10] sm:$0xff] %v993
        %1050 = vst [vmem:[%s337 + $0x18] sm:$0xff] %v996
        %1051 = vst [vmem:[%s337 + $0x20] sm:$0xff] %v1001
        %1052 = vst [vmem:[%s337 + $0x28] sm:$0xff] %v1004
        %1053 = vst [vmem:[%s337 + $0x30] sm:$0xff] %v1009
        %1054 = vst [vmem:[%s337 + $0x38] sm:$0xff] %v1012
        %1055 = vst [vmem:[%s337 + $0x40] sm:$0xff] %v1017
        %1056 = vst [vmem:[%s337 + $0x48] sm:$0xff] %v1020
        %1057 = vst [vmem:[%s337 + $0x50] sm:$0xff] %v1025
        %1058 = vst [vmem:[%s337 + $0x58] sm:$0xff] %v1028
        %1059 = vst [vmem:[%s337 + $0x60] sm:$0xff] %v1033
        %1060 = vst [vmem:[%s337 + $0x68] sm:$0xff] %v1036
        %1061 = vst [vmem:[%s337 + $0x70] sm:$0xff] %v1041
        %1062 = vst [vmem:[%s337 + $0x78] sm:$0xff] %v1044
        %s1063 = sand.u32 %s186, 1
        %s1064 = scalar_lea.sflag [#allocation4], %s1063
        %s1065 = sand.u32 %s186, 1
        %s1066 = smul.addr %s1065, 128
        %s1067 = scalar_lea.vmem [#allocation8], %s1066
        // Predicated region
        $region57: #{tpu_custom_call.1} parent=43 // pred_check
          %p1068 = pneg %p196
        $region58: #{tpu_custom_call.1} parent=43 // pred_check_branch
          %1070 = sbr.rel (%p1068) target = $region60
        $region59: #{tpu_custom_call.1} parent=43 // pred_region
          %s1071 = smul.u32 16, %s31
          %s1073 = ssub.s32 2048, 2048
          %1074 = vsyncadd %s1064, %s1073
          %s1075 = smul.addr %s30, 16
          %s1076 = sadd.s32 %s1071, %s1075
          %s1077 = smul.addr %s1076, 128
          %s1078 = scalar_lea.hbm %s6, %s1077
          %s1079 = sshll.u32 %s1067, 4
          %s1080 = int_to_ptr.vmem [resolvable:$true] %s1079
          %1085 = dma.vmem_to_hbm [thread:$0]  %s1080, 2048, %s1078, %s1064, 128, 128, 8
        $region60: #{tpu_custom_call.1} parent=43 // pred_fallthru
          _
      $region44: #{tpu_custom_call.1} parent=5 // pred_fallthru
        _
      %p1086 = scmp.le.s32.totalorder 2, %s21
      // Predicated region
      $region61: #{tpu_custom_call.1} parent=5 // pred_check
        %p1087 = pneg %p1086
      $region62: #{tpu_custom_call.1} parent=5 // pred_check_branch
        %1089 = sbr.rel (%p1087) target = $region64
      $region63: #{tpu_custom_call.1} parent=5 // pred_region
        %s1090 = ssub.s32 %s21, 2
        // Predicated region
        $region65: #{tpu_custom_call.1} parent=63 // pred_check
          %p1091 = pneg %p202
        $region66: #{tpu_custom_call.1} parent=63 // pred_check_branch
          %1093 = sbr.rel (%p1091) target = $region68
        $region67: #{tpu_custom_call.1} parent=63 // pred_region
          %s1094 = sand.u32 %s187, 1
          %s1095 = scalar_lea.sflag [#allocation4], %s1094
          %s1096 = sand.u32 %s187, 1
          %s1097 = smul.addr %s1096, 128
          %s1098 = scalar_lea.vmem [#allocation8], %s1097
          %1099 = dma.done %s1095, 2048
        $region68: #{tpu_custom_call.1} parent=63 // pred_fallthru
          _
      $region64: #{tpu_custom_call.1} parent=5 // pred_fallthru
        _
    $region6: #{tpu_custom_call.1} parent=1 // loop_footer
      %s25 = sadd.s32 1, %s21
    $region7: #{tpu_custom_call.1} parent=1 // loop_footer_branch
      %20 = sbr.rel target = $region3
    $region8: #{tpu_custom_call.1} parent=1 // loop_exit
      _
    %1100 = vsyncpa [#allocation3], 1
    %s1101 = scalar_lea.sflag [#allocation3], 1
    %1102 = vsyncpa %s1101, 1
    %1103 = vsyncpa [#allocation6], 1
    %s1104 = scalar_lea.sflag [#allocation6], 1
    %1105 = vsyncpa %s1104, 1
    %1106 = vsyncpa [#allocation4], 1
    %s1107 = scalar_lea.sflag [#allocation4], 1
    %1108 = vsyncpa %s1107, 1

</llo_original>
